<compile_context>
chip_gen: v7x
topology: tpu7x:2x2x1
jax: 0.10.0
libtpu: 0.0.40
codegen_flags: <defaults>
</compile_context>

<pallas_src>
import functools
import math

import jax
import jax.numpy as jnp
from jax import lax
from jax.experimental import pallas as pl
from jax.experimental.pallas import tpu as pltpu


def _round_up(x, m):
    return ((x + m - 1) // m) * m


# -----------------------------------------------------------------------------
# Pallas kernel 1: fused (x @ W) + bias [+ ReLU]   (Linear + folded BN + ReLU)
# -----------------------------------------------------------------------------
def _linear_kernel(x_ref, w_ref, b_ref, o_ref, *, relu):
    y = jnp.dot(x_ref[...], w_ref[...], preferred_element_type=jnp.float32)
    y = y + b_ref[...]
    if relu:
        y = jnp.maximum(y, 0.0)
    o_ref[...] = y.astype(o_ref.dtype)


def fused_linear(x, w, b, *, relu=True, tm=1024):
    """x: (M, Cin) bf16 -> (M, Cout) bf16; BN scale already folded into w."""
    M, Cin = x.shape
    Cout = w.shape[1]
    tm_eff = min(tm, _round_up(M, 8))
    return pl.pallas_call(
        functools.partial(_linear_kernel, relu=relu),
        out_shape=jax.ShapeDtypeStruct((M, Cout), x.dtype),
        grid_spec=pltpu.PrefetchScalarGridSpec(
            num_scalar_prefetch=0,
            grid=(pl.cdiv(M, tm_eff),),
            in_specs=[
                pl.BlockSpec((tm_eff, Cin), lambda i: (i, 0)),
                pl.BlockSpec((Cin, Cout), lambda i: (0, 0)),
                pl.BlockSpec((1, Cout), lambda i: (0, 0)),
            ],
            out_specs=pl.BlockSpec((tm_eff, Cout), lambda i: (i, 0)),
        ),
        compiler_params=pltpu.CompilerParams(dimension_semantics=("parallel",)),
    )(x, w, b)


# -----------------------------------------------------------------------------
# Pallas kernel 2: fused per-level point branch
#   proj(Linear+BN+ReLU) -> n residual MLP blocks -> keypoint cross-attention
#   (Q proj, masked softmax over padded keys, P@V, residual).  One HBM read of
#   x, one HBM write of the level output per tile; all weights resident.
# -----------------------------------------------------------------------------
def _level_kernel(x_ref, wp_ref, bp_ref, *rest, n_res, scale):
    res_refs = rest[:4 * n_res]
    wq_ref, gk_ref, gv_ref, km_ref, o_ref = rest[4 * n_res:]

    x = x_ref[...]                                                 # (tm, Cin) bf16
    h = jnp.dot(x, wp_ref[...], preferred_element_type=jnp.float32)
    h = jnp.maximum(h + bp_ref[...], 0.0)                          # (tm, C) f32

    for r in range(n_res):                                         # static, small
        w1, b1, w2, b2 = res_refs[4 * r:4 * r + 4]
        t = jnp.dot(h.astype(jnp.bfloat16), w1[...],
                    preferred_element_type=jnp.float32)
        t = jnp.maximum(t + b1[...], 0.0)
        t = jnp.dot(t.astype(jnp.bfloat16), w2[...],
                    preferred_element_type=jnp.float32)
        t = t + b2[...]
        h = jnp.maximum(h + t, 0.0)

    # keypoint cross-attention (LDCAugmentation stand-in), K/V hoisted outside
    q = jnp.dot(h.astype(jnp.bfloat16), wq_ref[...],
                preferred_element_type=jnp.float32)
    gk = gk_ref[...]                                               # (Kp, C) bf16
    gv = gv_ref[...]
    # q @ k^T without an explicit transpose (contract channel axis of both)
    s = lax.dot_general(q.astype(jnp.bfloat16), gk, (((1,), (1,)), ((), ())),
                        preferred_element_type=jnp.float32) * scale
    s = s + km_ref[...]                                            # mask padded keys
    s = s - jnp.max(s, axis=-1, keepdims=True)
    p = jnp.exp(s)
    p = p * pl.reciprocal(jnp.sum(p, axis=-1, keepdims=True), approx=True)
    att = jnp.dot(p.astype(jnp.bfloat16), gv, preferred_element_type=jnp.float32)
    o_ref[...] = (h + att).astype(o_ref.dtype)


def fused_level(x_b, wp, bp, res_params, wq, gk_b, gv_b, kmask, *, tm=1024):
    """x_b: (B, Mb, Cin); gk_b/gv_b: (B, Kp, C) hoisted keys/values (padded);
    kmask: (1, Kp) additive softmax mask.  Returns (B, Mb, C)."""
    B, Mb, Cin = x_b.shape
    C = wp.shape[1]
    Kp = gk_b.shape[1]
    scale = 1.0 / math.sqrt(C)
    n_res = len(res_params)
    tm_eff = min(tm, _round_up(Mb, 8))

    in_specs = [
        pl.BlockSpec((None, tm_eff, Cin), lambda b, i: (b, i, 0)),
        pl.BlockSpec((Cin, C), lambda b, i: (0, 0)),
        pl.BlockSpec((1, C), lambda b, i: (0, 0)),
    ]
    res_args = []
    for rp in res_params:
        in_specs += [pl.BlockSpec((C, C), lambda b, i: (0, 0)),
                     pl.BlockSpec((1, C), lambda b, i: (0, 0)),
                     pl.BlockSpec((C, C), lambda b, i: (0, 0)),
                     pl.BlockSpec((1, C), lambda b, i: (0, 0))]
        res_args += [rp["w1"], rp["b1"], rp["w2"], rp["b2"]]
    in_specs += [
        pl.BlockSpec((C, C), lambda b, i: (0, 0)),               # wq
        pl.BlockSpec((None, Kp, C), lambda b, i: (b, 0, 0)),     # gk
        pl.BlockSpec((None, Kp, C), lambda b, i: (b, 0, 0)),     # gv
        pl.BlockSpec((1, Kp), lambda b, i: (0, 0)),              # key mask
    ]
    return pl.pallas_call(
        functools.partial(_level_kernel, n_res=n_res, scale=scale),
        out_shape=jax.ShapeDtypeStruct((B, Mb, C), x_b.dtype),
        grid_spec=pltpu.PrefetchScalarGridSpec(
            num_scalar_prefetch=0,
            grid=(B, pl.cdiv(Mb, tm_eff)),
            in_specs=in_specs,
            out_specs=pl.BlockSpec((None, tm_eff, C), lambda b, i: (b, i, 0)),
        ),
        compiler_params=pltpu.CompilerParams(
            dimension_semantics=("parallel", "parallel"),
            vmem_limit_bytes=48 * 1024 * 1024),
    )(x_b, wp, bp, *res_args, wq, gk_b, gv_b, kmask)


# -----------------------------------------------------------------------------
# Pallas kernel 3: keypoint self-attention (LDCReasoning), one batch / program.
#   Fused (C, 3C) QKV matmul; grid=(B,) parallel so v7x shards across cores.
# -----------------------------------------------------------------------------
def _kp_attention_kernel(g_ref, wqkv_ref, wo_ref, o_ref, *, c, scale):
    g = g_ref[...]                                                 # (K, C) bf16
    qkv = jnp.dot(g, wqkv_ref[...], preferred_element_type=jnp.float32)
    q = qkv[:, :c].astype(jnp.bfloat16)
    k = qkv[:, c:2 * c].astype(jnp.bfloat16)
    v = qkv[:, 2 * c:].astype(jnp.bfloat16)
    s = lax.dot_general(q, k, (((1,), (1,)), ((), ())),
                        preferred_element_type=jnp.float32) * scale
    s = s - jnp.max(s, axis=-1, keepdims=True)
    p = jnp.exp(s)
    p = p * pl.reciprocal(jnp.sum(p, axis=-1, keepdims=True), approx=True)
    att = jnp.dot(p.astype(jnp.bfloat16), v, preferred_element_type=jnp.float32)
    out = jnp.dot(att.astype(jnp.bfloat16), wo_ref[...],
                  preferred_element_type=jnp.float32)
    o_ref[...] = jnp.maximum(g.astype(jnp.float32) + out, 0.0).astype(o_ref.dtype)


def keypoint_self_attention(gx_b, wqkv, wo):
    """gx_b: (B, K, C) -> (B, K, C).  Single-head stand-in.  TODO(synk): the
    reference LDCReasoning takes an extra arg (8) that may be #heads."""
    B, K, C = gx_b.shape
    scale = 1.0 / math.sqrt(C)
    return pl.pallas_call(
        functools.partial(_kp_attention_kernel, c=C, scale=scale),
        out_shape=jax.ShapeDtypeStruct((B, K, C), gx_b.dtype),
        grid_spec=pltpu.PrefetchScalarGridSpec(
            num_scalar_prefetch=0,
            grid=(B,),
            in_specs=[
                pl.BlockSpec((None, K, C), lambda b: (b, 0, 0)),
                pl.BlockSpec((C, 3 * C), lambda b: (0, 0)),
                pl.BlockSpec((C, C), lambda b: (0, 0)),
            ],
            out_specs=pl.BlockSpec((None, K, C), lambda b: (b, 0, 0)),
        ),
        compiler_params=pltpu.CompilerParams(dimension_semantics=("parallel",)),
    )(gx_b, wqkv, wo)


# -----------------------------------------------------------------------------
# Pallas kernel 4: furthest point sampling, one batch per program.
#   Running-min distance vector resident in VMEM across all K steps; argmax
#   realised as (max, where==, min-of-iota) reductions (no HBM round trips).
# -----------------------------------------------------------------------------
def _fps_kernel(pts_ref, idx_ref, dist_ref, *, k, nb):
    pts = pts_ref[...]                                             # (3, Nb) f32
    dist_ref[...] = jnp.full((1, nb), 1e10, jnp.float32)
    lane_iota = lax.broadcasted_iota(jnp.int32, (1, nb), 1)
    col_iota = lax.broadcasted_iota(jnp.int32, (8, k), 1)
    idx_ref[...] = jnp.zeros((8, k), jnp.int32)                    # idx[0] = 0

    def body(i, last):                                             # last: (3,1) f32
        d = jnp.sum((pts - last) ** 2, axis=0, keepdims=True)      # (1, Nb)
        nd = jnp.minimum(dist_ref[...], d)
        dist_ref[...] = nd
        m = jnp.max(nd, axis=1, keepdims=True)                     # (1, 1)
        cand = jnp.where(nd == m, lane_iota, jnp.int32(nb))
        nxt = jnp.min(cand)                                        # scalar int32
        idx_ref[...] = jnp.where(col_iota == i, nxt, idx_ref[...])
        sel = (lane_iota == nxt).astype(jnp.float32)
        new_last = jnp.sum(pts * sel, axis=1, keepdims=True)       # (3, 1)
        return new_last

    lax.fori_loop(1, k, body, pts[:, 0:1])


def fps_keypoints(pts_t, k):
    """pts_t: (B, 3, Nb) f32 coords -> (B, K) int32 FPS indices per batch."""
    B, _, Nb = pts_t.shape
    out = pl.pallas_call(
        functools.partial(_fps_kernel, k=k, nb=Nb),
        out_shape=jax.ShapeDtypeStruct((B, 8, k), jnp.int32),
        grid_spec=pltpu.PrefetchScalarGridSpec(
            num_scalar_prefetch=0,
            grid=(B,),
            in_specs=[pl.BlockSpec((None, 3, Nb), lambda b: (b, 0, 0))],
            out_specs=pl.BlockSpec((None, 8, k), lambda b: (b, 0, 0)),
            scratch_shapes=[pltpu.VMEM((1, Nb), jnp.float32)],
        ),
        compiler_params=pltpu.CompilerParams(dimension_semantics=("parallel",)),
    )(pts_t)
    return out[:, 0, :]


# -----------------------------------------------------------------------------
# Parameter construction (deterministic, BN scale folded into weights, bf16)
# -----------------------------------------------------------------------------
def make_linear_params(key, cin, cout):
    k1, k2, k3 = jax.random.split(key, 3)
    w = jax.random.normal(k1, (cin, cout), jnp.float32) / math.sqrt(cin)
    s = 1.0 + 0.02 * jax.random.normal(k2, (1, cout), jnp.float32)
    b = 0.02 * jax.random.normal(k3, (1, cout), jnp.float32)
    # fold BN scale into W; TODO(synk): real checkpoints must also fold
    # -running_mean*scale + beta into the bias.
    return {"w": (w * s).astype(jnp.bfloat16), "b": b}


def make_mssca_params(key, cin, n_scales, rgb_importance):
    """TODO(synk): true MSSCA undefined; stand-in = n_scales point-wise 8-channel
    projections fused into ONE (cin, n_scales*8) weight (lane-dense output)."""
    keys = jax.random.split(key, 3 * n_scales)
    ws, bs = [], []
    for j in range(n_scales):
        w = jax.random.normal(keys[3 * j], (cin, 8), jnp.float32) / math.sqrt(cin)
        s = 1.0 + 0.02 * jax.random.normal(keys[3 * j + 1], (1, 8), jnp.float32)
        b = 0.02 * jax.random.normal(keys[3 * j + 2], (1, 8), jnp.float32)
        ws.append(w * s)
        bs.append(b)
    w = jnp.concatenate(ws, axis=1)
    b = jnp.concatenate(bs, axis=1)
    # fold x[:, 3:] *= rgb_importance into the rgb rows of the weight
    w = w.at[3:, :].multiply(rgb_importance)
    return {"w": w.astype(jnp.bfloat16), "b": b}


def make_reason_params(key, c):
    k1, k2 = jax.random.split(key)
    wqkv = jax.random.normal(k1, (c, 3 * c), jnp.float32) / math.sqrt(c)
    wo = jax.random.normal(k2, (c, c), jnp.float32) / math.sqrt(c)
    return {"wqkv": wqkv.astype(jnp.bfloat16), "wo": wo.astype(jnp.bfloat16)}


def make_aug_params(key, c):
    k1, k2 = jax.random.split(key)
    wq = jax.random.normal(k1, (c, c), jnp.float32) / math.sqrt(c)
    wkv = jax.random.normal(k2, (c, 2 * c), jnp.float32) / math.sqrt(c)
    return {"wq": wq.astype(jnp.bfloat16),
            "wkv": wkv.astype(jnp.bfloat16),
            "zb2": jnp.zeros((1, 2 * c), jnp.float32)}


def build_ldc_encoder_params(key, in_channels, channels, enc_blocks,
                             g_blocknumber, spatial_scales, rgb_importance):
    params = {}
    n_scales = len(spatial_scales) + 1
    keys = iter(jax.random.split(key, 256))

    params["mssca"] = make_mssca_params(next(keys), in_channels, n_scales,
                                        rgb_importance)

    # encoder (point) branch
    params["enc"] = []
    cur = n_scales * 8
    for i, c in enumerate(channels):
        lvl = {"proj": make_linear_params(next(keys), cur, c), "res": []}
        # TODO(synk): MODELS.build(block) body unknown; stand-in residual MLP.
        for _ in range(enc_blocks[i]["repeats"]):
            l1 = make_linear_params(next(keys), c, c)
            l2 = make_linear_params(next(keys), c, c)
            lvl["res"].append({"w1": l1["w"], "b1": l1["b"],
                               "w2": l2["w"], "b2": l2["b"]})
        params["enc"].append(lvl)
        cur = c

    # keypoint (ldc) branch
    g_channels = [channels[0]] + list(channels)
    params["ldc_enc"] = []
    for i in range(len(channels)):
        lvl = {"unary": make_linear_params(next(keys), g_channels[i],
                                           g_channels[i + 1]),
               "reason": [make_reason_params(next(keys), g_channels[i + 1])
                          for _ in range(g_blocknumber[i])]}
        params["ldc_enc"].append(lvl)

    # augmentation blocks
    # TODO(synk): reference indexes ldc_aug[i] for every level while only
    # len(channels)-1 blocks exist (off-by-one in the source); here one
    # channel-matched augmentation block is built per level.
    params["ldc_aug"] = [make_aug_params(next(keys), c) for c in channels]
    return params


# -----------------------------------------------------------------------------
# Forward pass (mirrors LDCEncoder.forward)
# -----------------------------------------------------------------------------
def ldc_encoder_forward(params, input_dict, *, channels, num_keypoints,
                        batch_size):
    p0 = input_dict["coord"]                                 # (N, 3) f32
    x_in = input_dict["feat"].astype(jnp.bfloat16)           # (N, Cin)
    o0 = input_dict["offset"].astype(jnp.int32)              # (B,)
    N = x_in.shape[0]
    B = batch_size
    # TODO(synk): equal-sized batches assumed; reference supports ragged offsets.
    Nb = N // B
    K = num_keypoints

    # MSSCA (rgb_importance + BN scale folded into the single fused weight).
    x0 = fused_linear(x_in, params["mssca"]["w"], params["mssca"]["b"], relu=True)

    # get_keypoints_furthest: Pallas FPS, running-min distances resident in VMEM.
    p_b = p0.reshape(B, Nb, 3)
    pts_t = jnp.transpose(p_b, (0, 2, 1))                    # (B, 3, Nb)
    kp_idx = fps_keypoints(pts_t, K)                         # (B, K) int32
    x_b0 = x0.reshape(B, Nb, -1)
    gp0 = jnp.take_along_axis(p_b, kp_idx[:, :, None], axis=1).reshape(-1, 3)
    gx0 = jnp.take_along_axis(x_b0, kp_idx[:, :, None], axis=1
                              ).reshape(-1, x0.shape[-1])
    go0 = jnp.arange(1, B + 1, dtype=jnp.int32) * K

    position_set, feature_set, offset_set = [p0], [x0], [o0]
    g_position_set, g_feature_set, g_offset_set = [gp0], [gx0], [go0]

    Kp = _round_up(K, 128)                                   # lane-dense keys
    kmask = jnp.where(jnp.arange(Kp) < K, 0.0, -1e30
                      ).astype(jnp.float32)[None, :]

    nb_cur = Nb
    for i, c in enumerate(channels):
        p, x, o = position_set[-1], feature_set[-1], offset_set[-1]
        gp, gx, go = g_position_set[-1], g_feature_set[-1], g_offset_set[-1]
        lvl = params["enc"][i]

        cin = x.shape[-1]
        xb = x.reshape(B, nb_cur, cin)
        if i > 0:
            # TODO(synk): TransitionDown(sampler, pooling) grouping undefined;
            # stand-in = per-batch stride-4 subsample before the fused level pass.
            pb = p.reshape(B, nb_cur, 3)[:, ::4]
            xb = xb[:, ::4]
            nb_cur //= 4
            p = pb.reshape(-1, 3)
            o = jnp.arange(1, B + 1, dtype=jnp.int32) * nb_cur

        # --- ldc_enc[i]: keypoint branch (independent of point branch; run
        #     first so its K/V can be hoisted into the fused point kernel) -----
        glvl = params["ldc_enc"][i]
        gx = fused_linear(gx, glvl["unary"]["w"], glvl["unary"]["b"], relu=True)
        gx_b = gx.reshape(B, K, c)
        for rp in glvl["reason"]:
            gx_b = keypoint_self_attention(gx_b, rp["wqkv"], rp["wo"])
        gx = gx_b.reshape(B * K, c)

        # hoist cross-attention K/V: ONE fused (C, 2C) matmul per level
        aug = params["ldc_aug"][i]
        gkv = fused_linear(gx, aug["wkv"], aug["zb2"], relu=False)   # (B*K, 2C)
        gkv_b = gkv.reshape(B, K, 2 * c)
        gk_b, gv_b = gkv_b[:, :, :c], gkv_b[:, :, c:]
        if Kp != K:
            pad = Kp - K
            gk_b = jnp.pad(gk_b, ((0, 0), (0, pad), (0, 0)))
            gv_b = jnp.pad(gv_b, ((0, 0), (0, pad), (0, 0)))

        # --- enc[i] + ldc_aug[i]: single fused point-branch kernel ------------
        xb = fused_level(xb, lvl["proj"]["w"], lvl["proj"]["b"], lvl["res"],
                         aug["wq"], gk_b, gv_b, kmask)
        x = xb.reshape(-1, c)

        position_set.append(p)
        feature_set.append(x)
        offset_set.append(o)
        g_position_set.append(gp)
        g_feature_set.append(gx)
        g_offset_set.append(go)

    output_dict = {
        "point_set_positions": position_set[1:],
        "point_set_features": feature_set[1:],
        "point_set_offsets": offset_set[1:],
    }
    output_dict.update(input_dict)
    return output_dict


# -----------------------------------------------------------------------------
# Main
# -----------------------------------------------------------------------------
if __name__ == "__main__":
    key = jax.random.PRNGKey(0)
    k_coord, k_feat, k_params = jax.random.split(key, 3)

    # Small config consistent with the module's constructor.
    in_channels = 6                      # xyz + rgb
    channels = [32, 64, 128]
    enc_blocks = [{"repeats": 1}] * 3
    g_blocknumber = [1, 1, 1]
    spatial_scales = [8, 16, 32]
    num_keypoints = 128                  # multiple of 128 -> lane-dense keys
    rgb_importance = 0.5
    batch_size = 2
    points_per_batch = 256
    N = batch_size * points_per_batch

    coord = jax.random.uniform(k_coord, (N, 3), jnp.float32) * 4.0
    rgb = jax.random.uniform(k_feat, (N, 3), jnp.float32)
    feat = jnp.concatenate([coord, rgb], axis=-1)          # (N, 6)
    offset = jnp.arange(1, batch_size + 1, dtype=jnp.int32) * points_per_batch

    input_dict = {"coord": coord, "feat": feat, "offset": offset}

    params = build_ldc_encoder_params(k_params, in_channels, channels,
                                      enc_blocks, g_blocknumber,
                                      spatial_scales, rgb_importance)

    out = ldc_encoder_forward(params, input_dict,
                              channels=channels,
                              num_keypoints=num_keypoints,
                              batch_size=batch_size)

    jax.block_until_ready(out["point_set_features"][-1])

    # light sanity checks on shapes / values
    assert out["point_set_features"][0].shape == (512, 32)
    assert out["point_set_features"][1].shape == (128, 64)
    assert out["point_set_features"][2].shape == (32, 128)
    assert out["point_set_positions"][2].shape == (32, 3)
    assert all(bool(jnp.all(jnp.isfinite(f.astype(jnp.float32))))
               for f in out["point_set_features"])

    print("KERNEL_OK")
</pallas_src>

<mosaic_0001>
module attributes {stable_mosaic.version = 11 : i64} {
  func.func @_linear_kernel(%arg0: i32, %arg1: memref<512x6xbf16, #tpu.memory_space<vmem>>, %arg2: memref<6x32xbf16, #tpu.memory_space<vmem>>, %arg3: memref<1x32xf32, #tpu.memory_space<vmem>>, %arg4: memref<512x32xbf16, #tpu.memory_space<vmem>>) attributes {dimension_semantics = [#tpu.dimension_semantics<parallel>], iteration_bounds = array<i64: 1>, scalar_prefetch = 0 : i64, scratch_operands = 0 : i64, tpu.core_type = #tpu.core_type<tc>, window_params = [{transform_indices = @transform_0, window_bounds = array<i64: 512, 6>}, {pipeline_mode = #tpu.pipeline_mode<synchronous>, transform_indices = @transform_1, window_bounds = array<i64: 6, 32>}, {pipeline_mode = #tpu.pipeline_mode<synchronous>, transform_indices = @transform_2, window_bounds = array<i64: 1, 32>}, {transform_indices = @transform_3, window_bounds = array<i64: 512, 32>}]} {
    %c0 = arith.constant 0 : index
    %c0_0 = arith.constant 0 : index
    %0 = vector.load %arg1[%c0, %c0_0] : memref<512x6xbf16, #tpu.memory_space<vmem>>, vector<512x6xbf16>
    %c0_1 = arith.constant 0 : index
    %c0_2 = arith.constant 0 : index
    %1 = vector.load %arg2[%c0_1, %c0_2] : memref<6x32xbf16, #tpu.memory_space<vmem>>, vector<6x32xbf16>
    %cst = arith.constant dense<0.000000e+00> : vector<512x32xf32>
    %2 = tpu.matmul %0, %1, %cst {dimension_numbers = #tpu.dot_dimension_numbers<[1], [0], [0], [1], [0, 0, 1, 1], [], []>} : vector<512x6xbf16>, vector<6x32xbf16>, vector<512x32xf32> -> vector<512x32xf32>
    %c0_3 = arith.constant 0 : index
    %c0_4 = arith.constant 0 : index
    %3 = vector.load %arg3[%c0_3, %c0_4] : memref<1x32xf32, #tpu.memory_space<vmem>>, vector<1x32xf32>
    %4 = vector.broadcast %3 : vector<1x32xf32> to vector<512x32xf32>
    %5 = arith.addf %2, %4 : vector<512x32xf32>
    %cst_5 = arith.constant 0.000000e+00 : f32
    %6 = vector.broadcast %cst_5 : f32 to vector<512x32xf32>
    %7 = arith.maximumf %5, %6 : vector<512x32xf32>
    %8 = arith.truncf %7 : vector<512x32xf32> to vector<512x32xbf16>
    %c0_6 = arith.constant 0 : index
    %c0_7 = arith.constant 0 : index
    %9 = vector.load %arg4[%c0_6, %c0_7] : memref<512x32xbf16, #tpu.memory_space<vmem>>, vector<512x32xbf16>
    tpu.vector_store %arg4[%c0_6, %c0_7], %8 {strides = array<i32>} : memref<512x32xbf16, #tpu.memory_space<vmem>>, vector<512x32xbf16>,
    return
  }
  func.func @transform_0(%arg0: i32) -> (i32, i32) {
    %c0_i32 = arith.constant 0 : i32
    %c0_i32_0 = arith.constant 0 : i32
    return %arg0, %c0_i32 : i32, i32
  }
  func.func @transform_1(%arg0: i32) -> (i32, i32) {
    %c0_i32 = arith.constant 0 : i32
    %c0_i32_0 = arith.constant 0 : i32
    %c0_i32_1 = arith.constant 0 : i32
    return %c0_i32, %c0_i32_0 : i32, i32
  }
  func.func @transform_2(%arg0: i32) -> (i32, i32) {
    %c0_i32 = arith.constant 0 : i32
    %c0_i32_0 = arith.constant 0 : i32
    %c0_i32_1 = arith.constant 0 : i32
    return %c0_i32, %c0_i32_0 : i32, i32
  }
  func.func @transform_3(%arg0: i32) -> (i32, i32) {
    %c0_i32 = arith.constant 0 : i32
    %c0_i32_0 = arith.constant 0 : i32
    return %arg0, %c0_i32 : i32, i32
  }
}

</mosaic_0001>

<llo_original>
// kernel: tpu_custom_call.1
$region0: #{tpu_custom_call.1}
  #allocation0 [shape = 'u32[]', space=smem, size = 0x4, offset = 0x4, fixed_abs, tag = 'smem constant byte address 0x4 - core index']
  #allocation1 [shape = 'u32[144,128]{1,0:T(1,128)}', space=vmem, size = 0x12000, scoped, tag = 'internal scratch']
  %s0 = inlined_call_operand.vmem [shape: bf16[512,6], index: 0, kind: input, shape index: {}]
  %s1 = inlined_call_operand.vmem [shape: bf16[6,32], index: 1, kind: input, shape index: {}]
  %s2 = inlined_call_operand.vmem [shape: f32[1,32], index: 2, kind: input, shape index: {}]
  %s3 = inlined_call_operand.vmem [shape: bf16[512,32], index: 3, kind: output, shape index: {}]
  %s4 = sld [smem:[#allocation0]]
  $region22: #{tpu_custom_call.1} parent=0
    _
  %s6 = ssub.s32 1, %s4
  %s7 = scalar_select 0, %s6, %s4
  // Predicated region
  $region2: #{tpu_custom_call.1} parent=0 // pred_check
    _
  $region3: #{tpu_custom_call.1} parent=0 // pred_check_branch
    %9 = sbr.rel (0) target = $region5
  $region4: #{tpu_custom_call.1} parent=0 // pred_region
    _
  $region5: #{tpu_custom_call.1} parent=0 // pred_fallthru
    _
  // Predicated region
  $region6: #{tpu_custom_call.1} parent=0 // pred_check
    _
  $region7: #{tpu_custom_call.1} parent=0 // pred_check_branch
    %11 = sbr.rel (0) target = $region9
  $region8: #{tpu_custom_call.1} parent=0 // pred_region
    _
  $region9: #{tpu_custom_call.1} parent=0 // pred_fallthru
    _
  // Predicated region
  $region10: #{tpu_custom_call.1} parent=0 // pred_check
    _
  $region11: #{tpu_custom_call.1} parent=0 // pred_check_branch
    %13 = sbr.rel (0) target = $region13
  $region12: #{tpu_custom_call.1} parent=0 // pred_region
    _
  $region13: #{tpu_custom_call.1} parent=0 // pred_fallthru
    _
  %v15 = vld [vmem:[%s0] sm:$0xf]
  %v16 = vld [vmem:[%s0 + $0x4] sm:$0xf]
  %v17 = vld [vmem:[%s0 + $0x8] sm:$0xf]
  %v18 = vld [vmem:[%s0 + $0xc] sm:$0xf]
  %v19 = vld [vmem:[%s0 + $0x10] sm:$0xf]
  %v20 = vld [vmem:[%s0 + $0x14] sm:$0xf]
  %v21 = vld [vmem:[%s0 + $0x18] sm:$0xf]
  %v22 = vld [vmem:[%s0 + $0x1c] sm:$0xf]
  %v23 = vld [vmem:[%s0 + $0x20] sm:$0xf]
  %v24 = vld [vmem:[%s0 + $0x24] sm:$0xf]
  %v25 = vld [vmem:[%s0 + $0x28] sm:$0xf]
  %v26 = vld [vmem:[%s0 + $0x2c] sm:$0xf]
  %v27 = vld [vmem:[%s0 + $0x30] sm:$0xf]
  %v28 = vld [vmem:[%s0 + $0x34] sm:$0xf]
  %v29 = vld [vmem:[%s0 + $0x38] sm:$0xf]
  %v30 = vld [vmem:[%s0 + $0x3c] sm:$0xf]
  %v31 = vld [vmem:[%s0 + $0x40] sm:$0xf]
  %v32 = vld [vmem:[%s0 + $0x44] sm:$0xf]
  %v33 = vld [vmem:[%s0 + $0x48] sm:$0xf]
  %v34 = vld [vmem:[%s0 + $0x4c] sm:$0xf]
  %v35 = vld [vmem:[%s0 + $0x50] sm:$0xf]
  %v36 = vld [vmem:[%s0 + $0x54] sm:$0xf]
  %v37 = vld [vmem:[%s0 + $0x58] sm:$0xf]
  %v38 = vld [vmem:[%s0 + $0x5c] sm:$0xf]
  %v39 = vld [vmem:[%s0 + $0x60] sm:$0xf]
  %v40 = vld [vmem:[%s0 + $0x64] sm:$0xf]
  %v41 = vld [vmem:[%s0 + $0x68] sm:$0xf]
  %v42 = vld [vmem:[%s0 + $0x6c] sm:$0xf]
  %v43 = vld [vmem:[%s0 + $0x70] sm:$0xf]
  %v44 = vld [vmem:[%s0 + $0x74] sm:$0xf]
  %v45 = vld [vmem:[%s0 + $0x78] sm:$0xf]
  %v46 = vld [vmem:[%s0 + $0x7c] sm:$0xf]
  %v47 = vld [vmem:[%s0 + $0x80] sm:$0xf]
  %v48 = vld [vmem:[%s0 + $0x84] sm:$0xf]
  %v49 = vld [vmem:[%s0 + $0x88] sm:$0xf]
  %v50 = vld [vmem:[%s0 + $0x8c] sm:$0xf]
  %v51 = vld [vmem:[%s0 + $0x90] sm:$0xf]
  %v52 = vld [vmem:[%s0 + $0x94] sm:$0xf]
  %v53 = vld [vmem:[%s0 + $0x98] sm:$0xf]
  %v54 = vld [vmem:[%s0 + $0x9c] sm:$0xf]
  %v55 = vld [vmem:[%s0 + $0xa0] sm:$0xf]
  %v56 = vld [vmem:[%s0 + $0xa4] sm:$0xf]
  %v57 = vld [vmem:[%s0 + $0xa8] sm:$0xf]
  %v58 = vld [vmem:[%s0 + $0xac] sm:$0xf]
  %v59 = vld [vmem:[%s0 + $0xb0] sm:$0xf]
  %v60 = vld [vmem:[%s0 + $0xb4] sm:$0xf]
  %v61 = vld [vmem:[%s0 + $0xb8] sm:$0xf]
  %v62 = vld [vmem:[%s0 + $0xbc] sm:$0xf]
  %v63 = vld [vmem:[%s0 + $0xc0] sm:$0xf]
  %v64 = vld [vmem:[%s0 + $0xc4] sm:$0xf]
  %v65 = vld [vmem:[%s0 + $0xc8] sm:$0xf]
  %v66 = vld [vmem:[%s0 + $0xcc] sm:$0xf]
  %v67 = vld [vmem:[%s0 + $0xd0] sm:$0xf]
  %v68 = vld [vmem:[%s0 + $0xd4] sm:$0xf]
  %v69 = vld [vmem:[%s0 + $0xd8] sm:$0xf]
  %v70 = vld [vmem:[%s0 + $0xdc] sm:$0xf]
  %v71 = vld [vmem:[%s0 + $0xe0] sm:$0xf]
  %v72 = vld [vmem:[%s0 + $0xe4] sm:$0xf]
  %v73 = vld [vmem:[%s0 + $0xe8] sm:$0xf]
  %v74 = vld [vmem:[%s0 + $0xec] sm:$0xf]
  %v75 = vld [vmem:[%s0 + $0xf0] sm:$0xf]
  %v76 = vld [vmem:[%s0 + $0xf4] sm:$0xf]
  %v77 = vld [vmem:[%s0 + $0xf8] sm:$0xf]
  %v78 = vld [vmem:[%s0 + $0xfc] sm:$0xf]
  %v79 = vld [vmem:[%s1] sm:$0x7]
  %v80 = vld [vmem:[%s2] sm:$0x1]
  %v82 = vlaneseq
  %v83 = vshrl.u32 %v82, 7
  %v84 = vsub.s32 0, %v83
  %v85 = vrot.slane %v80, %v84
  %v151 = vunpack.c.l.b16 %v15
  %v152 = vunpack.c.l.b16 %v16
  %v153 = vunpack.c.l.b16 %v17
  %v154 = vunpack.c.l.b16 %v18
  %v155 = vunpack.c.l.b16 %v19
  %v156 = vunpack.c.l.b16 %v20
  %v157 = vunpack.c.l.b16 %v21
  %v158 = vunpack.c.l.b16 %v22
  %v159 = vunpack.c.l.b16 %v23
  %v160 = vunpack.c.l.b16 %v24
  %v161 = vunpack.c.l.b16 %v25
  %v162 = vunpack.c.l.b16 %v26
  %v163 = vunpack.c.l.b16 %v27
  %v164 = vunpack.c.l.b16 %v28
  %v165 = vunpack.c.l.b16 %v29
  %v166 = vunpack.c.l.b16 %v30
  %v167 = vunpack.c.l.b16 %v31
  %v168 = vunpack.c.l.b16 %v32
  %v169 = vunpack.c.l.b16 %v33
  %v170 = vunpack.c.l.b16 %v34
  %v171 = vunpack.c.l.b16 %v35
  %v172 = vunpack.c.l.b16 %v36
  %v173 = vunpack.c.l.b16 %v37
  %v174 = vunpack.c.l.b16 %v38
  %v175 = vunpack.c.l.b16 %v39
  %v176 = vunpack.c.l.b16 %v40
  %v177 = vunpack.c.l.b16 %v41
  %v178 = vunpack.c.l.b16 %v42
  %v179 = vunpack.c.l.b16 %v43
  %v180 = vunpack.c.l.b16 %v44
  %v181 = vunpack.c.l.b16 %v45
  %v182 = vunpack.c.l.b16 %v46
  %v183 = vunpack.c.l.b16 %v47
  %v184 = vunpack.c.l.b16 %v48
  %v185 = vunpack.c.l.b16 %v49
  %v186 = vunpack.c.l.b16 %v50
  %v187 = vunpack.c.l.b16 %v51
  %v188 = vunpack.c.l.b16 %v52
  %v189 = vunpack.c.l.b16 %v53
  %v190 = vunpack.c.l.b16 %v54
  %v191 = vunpack.c.l.b16 %v55
  %v192 = vunpack.c.l.b16 %v56
  %v193 = vunpack.c.l.b16 %v57
  %v194 = vunpack.c.l.b16 %v58
  %v195 = vunpack.c.l.b16 %v59
  %v196 = vunpack.c.l.b16 %v60
  %v197 = vunpack.c.l.b16 %v61
  %v198 = vunpack.c.l.b16 %v62
  %v199 = vunpack.c.l.b16 %v63
  %v200 = vunpack.c.l.b16 %v64
  %v201 = vunpack.c.l.b16 %v65
  %v202 = vunpack.c.l.b16 %v66
  %v203 = vunpack.c.l.b16 %v67
  %v204 = vunpack.c.l.b16 %v68
  %v205 = vunpack.c.l.b16 %v69
  %v206 = vunpack.c.l.b16 %v70
  %v207 = vunpack.c.l.b16 %v71
  %v208 = vunpack.c.l.b16 %v72
  %v209 = vunpack.c.l.b16 %v73
  %v210 = vunpack.c.l.b16 %v74
  %v211 = vunpack.c.l.b16 %v75
  %v212 = vunpack.c.l.b16 %v76
  %v213 = vunpack.c.l.b16 %v77
  %v214 = vunpack.c.l.b16 %v78
  %v215 = vpack.c.b16 %v152, %v151
  %v216 = vpack.c.b16 %v154, %v153
  %v217 = vpack.c.b16 %v156, %v155
  %v218 = vpack.c.b16 %v158, %v157
  %v219 = vpack.c.b16 %v160, %v159
  %v220 = vpack.c.b16 %v162, %v161
  %v221 = vpack.c.b16 %v164, %v163
  %v222 = vpack.c.b16 %v166, %v165
  %v223 = vpack.c.b16 %v168, %v167
  %v224 = vpack.c.b16 %v170, %v169
  %v225 = vpack.c.b16 %v172, %v171
  %v226 = vpack.c.b16 %v174, %v173
  %v227 = vpack.c.b16 %v176, %v175
  %v228 = vpack.c.b16 %v178, %v177
  %v229 = vpack.c.b16 %v180, %v179
  %v230 = vpack.c.b16 %v182, %v181
  %v231 = vpack.c.b16 %v184, %v183
  %v232 = vpack.c.b16 %v186, %v185
  %v233 = vpack.c.b16 %v188, %v187
  %v234 = vpack.c.b16 %v190, %v189
  %v235 = vpack.c.b16 %v192, %v191
  %v236 = vpack.c.b16 %v194, %v193
  %v237 = vpack.c.b16 %v196, %v195
  %v238 = vpack.c.b16 %v198, %v197
  %v239 = vpack.c.b16 %v200, %v199
  %v240 = vpack.c.b16 %v202, %v201
  %v241 = vpack.c.b16 %v204, %v203
  %v242 = vpack.c.b16 %v206, %v205
  %v243 = vpack.c.b16 %v208, %v207
  %v244 = vpack.c.b16 %v210, %v209
  %v245 = vpack.c.b16 %v212, %v211
  %v246 = vpack.c.b16 %v214, %v213
  %vm247 = vcmask 48128
  %v249 = vsel %vm247, %v215, 0
  %v252 = vsel %vm247, %v216, 0
  %v255 = vsel %vm247, %v217, 0
  %v258 = vsel %vm247, %v218, 0
  %v261 = vsel %vm247, %v219, 0
  %v264 = vsel %vm247, %v220, 0
  %v267 = vsel %vm247, %v221, 0
  %v270 = vsel %vm247, %v222, 0
  %v273 = vsel %vm247, %v223, 0
  %v276 = vsel %vm247, %v224, 0
  %v279 = vsel %vm247, %v225, 0
  %v282 = vsel %vm247, %v226, 0
  %v285 = vsel %vm247, %v227, 0
  %v288 = vsel %vm247, %v228, 0
  %v291 = vsel %vm247, %v229, 0
  %v294 = vsel %vm247, %v230, 0
  %v297 = vsel %vm247, %v231, 0
  %v300 = vsel %vm247, %v232, 0
  %v303 = vsel %vm247, %v233, 0
  %v306 = vsel %vm247, %v234, 0
  %v309 = vsel %vm247, %v235, 0
  %v312 = vsel %vm247, %v236, 0
  %v315 = vsel %vm247, %v237, 0
  %v318 = vsel %vm247, %v238, 0
  %v321 = vsel %vm247, %v239, 0
  %v324 = vsel %vm247, %v240, 0
  %v327 = vsel %vm247, %v241, 0
  %v330 = vsel %vm247, %v242, 0
  %v333 = vsel %vm247, %v243, 0
  %v336 = vsel %vm247, %v244, 0
  %v339 = vsel %vm247, %v245, 0
  %v342 = vsel %vm247, %v246, 0
  %vm344 = vcmask 1042432
  %v346 = vsel %vm344, %v79, 0
  %348 = vmatprep.subr.bf16.mxu0 0
  %349 = vmatpush1.bf16.msra.mxu0 %v346
  %350 = vmatprep.subr.bf16.mxu0 0
  %351 = vmatpush1.bf16.msra.mxu0 0
  %352 = vmatprep.subr.bf16.mxu0 0
  %353 = vmatpush1.bf16.msra.mxu0 0
  %354 = vmatprep.subr.bf16.mxu0 0
  %355 = vmatpush1.bf16.msra.mxu0 0
  %356 = vmatprep.subr.bf16.mxu0 0
  %357 = vmatpush1.bf16.msra.mxu0 0
  %358 = vmatprep.subr.bf16.mxu0 0
  %359 = vmatpush1.bf16.msra.mxu0 0
  %360 = vmatprep.subr.bf16.mxu0 0
  %361 = vmatpush1.bf16.msra.mxu0 0
  %362 = vmatprep.subr.bf16.mxu0 0
  %363 = vmatpush1.bf16.msra.mxu0 0
  %364 = vmatprep.subr.bf16.mxu0 0
  %365 = vmatpush1.bf16.msra.mxu0 0
  %366 = vmatprep.subr.bf16.mxu0 0
  %367 = vmatpush1.bf16.msra.mxu0 0
  %368 = vmatprep.subr.bf16.mxu0 0
  %369 = vmatpush1.bf16.msra.mxu0 0
  %370 = vmatprep.subr.bf16.mxu0 0
  %371 = vmatpush1.bf16.msra.mxu0 0
  %372 = vmatprep.subr.bf16.mxu0 0
  %373 = vmatpush1.bf16.msra.mxu0 0
  %374 = vmatprep.subr.bf16.mxu0 0
  %375 = vmatpush1.bf16.msra.mxu0 0
  %376 = vmatprep.subr.bf16.mxu0 0
  %377 = vmatpush1.bf16.msra.mxu0 0
  %378 = vmatprep.subr.bf16.mxu0 0
  %379 = vmatpush1.bf16.msra.mxu0 0
  %380 = vmatprep.mubr.bf16.mxu0 0
  %381 = vmatmul.mubr.bf16.gmra.mrb[0].mxu0 %v249
  %v382 = vpop.f32.mrb[0].mxu0
  %v383 = vadd.f32 %v85, %v382
  %v384 = vpop.f32.mrb[0].mxu0
  %v385 = vpop.f32.mrb[0].mxu0
  %v386 = vadd.f32 %v85, %v385
  %v387 = vpop.f32.mrb[0].mxu0
  %388 = vmatprep.mubr.bf16.mxu0 0
  %389 = vmatmul.mubr.bf16.gmra.mrb[0].mxu0 %v252
  %v390 = vpop.f32.mrb[0].mxu0
  %v391 = vadd.f32 %v85, %v390
  %v392 = vpop.f32.mrb[0].mxu0
  %v393 = vpop.f32.mrb[0].mxu0
  %v394 = vadd.f32 %v85, %v393
  %v395 = vpop.f32.mrb[0].mxu0
  %396 = vmatprep.mubr.bf16.mxu0 0
  %397 = vmatmul.mubr.bf16.gmra.mrb[0].mxu0 %v255
  %v398 = vpop.f32.mrb[0].mxu0
  %v399 = vadd.f32 %v85, %v398
  %v400 = vpop.f32.mrb[0].mxu0
  %v401 = vpop.f32.mrb[0].mxu0
  %v402 = vadd.f32 %v85, %v401
  %v403 = vpop.f32.mrb[0].mxu0
  %404 = vmatprep.mubr.bf16.mxu0 0
  %405 = vmatmul.mubr.bf16.gmra.mrb[0].mxu0 %v258
  %v406 = vpop.f32.mrb[0].mxu0
  %v407 = vadd.f32 %v85, %v406
  %v408 = vpop.f32.mrb[0].mxu0
  %v409 = vpop.f32.mrb[0].mxu0
  %v410 = vadd.f32 %v85, %v409
  %v411 = vpop.f32.mrb[0].mxu0
  %412 = vmatprep.mubr.bf16.mxu0 0
  %413 = vmatmul.mubr.bf16.gmra.mrb[0].mxu0 %v261
  %v414 = vpop.f32.mrb[0].mxu0
  %v415 = vadd.f32 %v85, %v414
  %v416 = vpop.f32.mrb[0].mxu0
  %v417 = vpop.f32.mrb[0].mxu0
  %v418 = vadd.f32 %v85, %v417
  %v419 = vpop.f32.mrb[0].mxu0
  %420 = vmatprep.mubr.bf16.mxu0 0
  %421 = vmatmul.mubr.bf16.gmra.mrb[0].mxu0 %v264
  %v422 = vpop.f32.mrb[0].mxu0
  %v423 = vadd.f32 %v85, %v422
  %v424 = vpop.f32.mrb[0].mxu0
  %v425 = vpop.f32.mrb[0].mxu0
  %v426 = vadd.f32 %v85, %v425
  %v427 = vpop.f32.mrb[0].mxu0
  %428 = vmatprep.mubr.bf16.mxu0 0
  %429 = vmatmul.mubr.bf16.gmra.mrb[0].mxu0 %v267
  %v430 = vpop.f32.mrb[0].mxu0
  %v431 = vadd.f32 %v85, %v430
  %v432 = vpop.f32.mrb[0].mxu0
  %v433 = vpop.f32.mrb[0].mxu0
  %v434 = vadd.f32 %v85, %v433
  %v435 = vpop.f32.mrb[0].mxu0
  %436 = vmatprep.mubr.bf16.mxu0 0
  %437 = vmatmul.mubr.bf16.gmra.mrb[0].mxu0 %v270
  %v438 = vpop.f32.mrb[0].mxu0
  %v439 = vadd.f32 %v85, %v438
  %v440 = vpop.f32.mrb[0].mxu0
  %v441 = vpop.f32.mrb[0].mxu0
  %v442 = vadd.f32 %v85, %v441
  %v443 = vpop.f32.mrb[0].mxu0
  %444 = vmatprep.mubr.bf16.mxu0 0
  %445 = vmatmul.mubr.bf16.gmra.mrb[0].mxu0 %v273
  %v446 = vpop.f32.mrb[0].mxu0
  %v447 = vadd.f32 %v85, %v446
  %v448 = vpop.f32.mrb[0].mxu0
  %v449 = vpop.f32.mrb[0].mxu0
  %v450 = vadd.f32 %v85, %v449
  %v451 = vpop.f32.mrb[0].mxu0
  %452 = vmatprep.mubr.bf16.mxu0 0
  %453 = vmatmul.mubr.bf16.gmra.mrb[0].mxu0 %v276
  %v454 = vpop.f32.mrb[0].mxu0
  %v455 = vadd.f32 %v85, %v454
  %v456 = vpop.f32.mrb[0].mxu0
  %v457 = vpop.f32.mrb[0].mxu0
  %v458 = vadd.f32 %v85, %v457
  %v459 = vpop.f32.mrb[0].mxu0
  %460 = vmatprep.mubr.bf16.mxu0 0
  %461 = vmatmul.mubr.bf16.gmra.mrb[0].mxu0 %v279
  %v462 = vpop.f32.mrb[0].mxu0
  %v463 = vadd.f32 %v85, %v462
  %v464 = vpop.f32.mrb[0].mxu0
  %v465 = vpop.f32.mrb[0].mxu0
  %v466 = vadd.f32 %v85, %v465
  %v467 = vpop.f32.mrb[0].mxu0
  %468 = vmatprep.mubr.bf16.mxu0 0
  %469 = vmatmul.mubr.bf16.gmra.mrb[0].mxu0 %v282
  %v470 = vpop.f32.mrb[0].mxu0
  %v471 = vadd.f32 %v85, %v470
  %v472 = vpop.f32.mrb[0].mxu0
  %v473 = vpop.f32.mrb[0].mxu0
  %v474 = vadd.f32 %v85, %v473
  %v475 = vpop.f32.mrb[0].mxu0
  %476 = vmatprep.mubr.bf16.mxu0 0
  %477 = vmatmul.mubr.bf16.gmra.mrb[0].mxu0 %v285
  %v478 = vpop.f32.mrb[0].mxu0
  %v479 = vadd.f32 %v85, %v478
  %v480 = vpop.f32.mrb[0].mxu0
  %v481 = vpop.f32.mrb[0].mxu0
  %v482 = vadd.f32 %v85, %v481
  %v483 = vpop.f32.mrb[0].mxu0
  %484 = vmatprep.mubr.bf16.mxu0 0
  %485 = vmatmul.mubr.bf16.gmra.mrb[0].mxu0 %v288
  %v486 = vpop.f32.mrb[0].mxu0
  %v487 = vadd.f32 %v85, %v486
  %v488 = vpop.f32.mrb[0].mxu0
  %v489 = vpop.f32.mrb[0].mxu0
  %v490 = vadd.f32 %v85, %v489
  %v491 = vpop.f32.mrb[0].mxu0
  %492 = vmatprep.mubr.bf16.mxu0 0
  %493 = vmatmul.mubr.bf16.gmra.mrb[0].mxu0 %v291
  %v494 = vpop.f32.mrb[0].mxu0
  %v495 = vadd.f32 %v85, %v494
  %v496 = vpop.f32.mrb[0].mxu0
  %v497 = vpop.f32.mrb[0].mxu0
  %v498 = vadd.f32 %v85, %v497
  %v499 = vpop.f32.mrb[0].mxu0
  %500 = vmatprep.mubr.bf16.mxu0 0
  %501 = vmatmul.mubr.bf16.gmra.mrb[0].mxu0 %v294
  %v502 = vpop.f32.mrb[0].mxu0
  %v503 = vadd.f32 %v85, %v502
  %v504 = vpop.f32.mrb[0].mxu0
  %v505 = vpop.f32.mrb[0].mxu0
  %v506 = vadd.f32 %v85, %v505
  %v507 = vpop.f32.mrb[0].mxu0
  %508 = vmatprep.mubr.bf16.mxu0 0
  %509 = vmatmul.mubr.bf16.gmra.mrb[0].mxu0 %v297
  %v510 = vpop.f32.mrb[0].mxu0
  %v511 = vadd.f32 %v85, %v510
  %v512 = vpop.f32.mrb[0].mxu0
  %v513 = vpop.f32.mrb[0].mxu0
  %v514 = vadd.f32 %v85, %v513
  %v515 = vpop.f32.mrb[0].mxu0
  %516 = vmatprep.mubr.bf16.mxu0 0
  %517 = vmatmul.mubr.bf16.gmra.mrb[0].mxu0 %v300
  %v518 = vpop.f32.mrb[0].mxu0
  %v519 = vadd.f32 %v85, %v518
  %v520 = vpop.f32.mrb[0].mxu0
  %v521 = vpop.f32.mrb[0].mxu0
  %v522 = vadd.f32 %v85, %v521
  %v523 = vpop.f32.mrb[0].mxu0
  %524 = vmatprep.mubr.bf16.mxu0 0
  %525 = vmatmul.mubr.bf16.gmra.mrb[0].mxu0 %v303
  %v526 = vpop.f32.mrb[0].mxu0
  %v527 = vadd.f32 %v85, %v526
  %v528 = vpop.f32.mrb[0].mxu0
  %v529 = vpop.f32.mrb[0].mxu0
  %v530 = vadd.f32 %v85, %v529
  %v531 = vpop.f32.mrb[0].mxu0
  %532 = vmatprep.mubr.bf16.mxu0 0
  %533 = vmatmul.mubr.bf16.gmra.mrb[0].mxu0 %v306
  %v534 = vpop.f32.mrb[0].mxu0
  %v535 = vadd.f32 %v85, %v534
  %v536 = vpop.f32.mrb[0].mxu0
  %v537 = vpop.f32.mrb[0].mxu0
  %v538 = vadd.f32 %v85, %v537
  %v539 = vpop.f32.mrb[0].mxu0
  %540 = vmatprep.mubr.bf16.mxu0 0
  %541 = vmatmul.mubr.bf16.gmra.mrb[0].mxu0 %v309
  %v542 = vpop.f32.mrb[0].mxu0
  %v543 = vadd.f32 %v85, %v542
  %v544 = vpop.f32.mrb[0].mxu0
  %v545 = vpop.f32.mrb[0].mxu0
  %v546 = vadd.f32 %v85, %v545
  %v547 = vpop.f32.mrb[0].mxu0
  %548 = vmatprep.mubr.bf16.mxu0 0
  %549 = vmatmul.mubr.bf16.gmra.mrb[0].mxu0 %v312
  %v550 = vpop.f32.mrb[0].mxu0
  %v551 = vadd.f32 %v85, %v550
  %v552 = vpop.f32.mrb[0].mxu0
  %v553 = vpop.f32.mrb[0].mxu0
  %v554 = vadd.f32 %v85, %v553
  %v555 = vpop.f32.mrb[0].mxu0
  %556 = vmatprep.mubr.bf16.mxu0 0
  %557 = vmatmul.mubr.bf16.gmra.mrb[0].mxu0 %v315
  %v558 = vpop.f32.mrb[0].mxu0
  %v559 = vadd.f32 %v85, %v558
  %v560 = vpop.f32.mrb[0].mxu0
  %v561 = vpop.f32.mrb[0].mxu0
  %v562 = vadd.f32 %v85, %v561
  %v563 = vpop.f32.mrb[0].mxu0
  %564 = vmatprep.mubr.bf16.mxu0 0
  %565 = vmatmul.mubr.bf16.gmra.mrb[0].mxu0 %v318
  %v566 = vpop.f32.mrb[0].mxu0
  %v567 = vadd.f32 %v85, %v566
  %v568 = vpop.f32.mrb[0].mxu0
  %v569 = vpop.f32.mrb[0].mxu0
  %v570 = vadd.f32 %v85, %v569
  %v571 = vpop.f32.mrb[0].mxu0
  %572 = vmatprep.mubr.bf16.mxu0 0
  %573 = vmatmul.mubr.bf16.gmra.mrb[0].mxu0 %v321
  %v574 = vpop.f32.mrb[0].mxu0
  %v575 = vadd.f32 %v85, %v574
  %v576 = vpop.f32.mrb[0].mxu0
  %v577 = vpop.f32.mrb[0].mxu0
  %v578 = vadd.f32 %v85, %v577
  %v579 = vpop.f32.mrb[0].mxu0
  %580 = vmatprep.mubr.bf16.mxu0 0
  %581 = vmatmul.mubr.bf16.gmra.mrb[0].mxu0 %v324
  %v582 = vpop.f32.mrb[0].mxu0
  %v583 = vadd.f32 %v85, %v582
  %v584 = vpop.f32.mrb[0].mxu0
  %v585 = vpop.f32.mrb[0].mxu0
  %v586 = vadd.f32 %v85, %v585
  %v587 = vpop.f32.mrb[0].mxu0
  %588 = vmatprep.mubr.bf16.mxu0 0
  %589 = vmatmul.mubr.bf16.gmra.mrb[0].mxu0 %v327
  %v590 = vpop.f32.mrb[0].mxu0
  %v591 = vadd.f32 %v85, %v590
  %v592 = vpop.f32.mrb[0].mxu0
  %v593 = vpop.f32.mrb[0].mxu0
  %v594 = vadd.f32 %v85, %v593
  %v595 = vpop.f32.mrb[0].mxu0
  %596 = vmatprep.mubr.bf16.mxu0 0
  %597 = vmatmul.mubr.bf16.gmra.mrb[0].mxu0 %v330
  %v598 = vpop.f32.mrb[0].mxu0
  %v599 = vadd.f32 %v85, %v598
  %v600 = vpop.f32.mrb[0].mxu0
  %v601 = vpop.f32.mrb[0].mxu0
  %v602 = vadd.f32 %v85, %v601
  %v603 = vpop.f32.mrb[0].mxu0
  %604 = vmatprep.mubr.bf16.mxu0 0
  %605 = vmatmul.mubr.bf16.gmra.mrb[0].mxu0 %v333
  %v606 = vpop.f32.mrb[0].mxu0
  %v607 = vadd.f32 %v85, %v606
  %v608 = vpop.f32.mrb[0].mxu0
  %v609 = vpop.f32.mrb[0].mxu0
  %v610 = vadd.f32 %v85, %v609
  %v611 = vpop.f32.mrb[0].mxu0
  %612 = vmatprep.mubr.bf16.mxu0 0
  %613 = vmatmul.mubr.bf16.gmra.mrb[0].mxu0 %v336
  %v614 = vpop.f32.mrb[0].mxu0
  %v615 = vadd.f32 %v85, %v614
  %v616 = vpop.f32.mrb[0].mxu0
  %v617 = vpop.f32.mrb[0].mxu0
  %v618 = vadd.f32 %v85, %v617
  %v619 = vpop.f32.mrb[0].mxu0
  %620 = vmatprep.mubr.bf16.mxu0 0
  %621 = vmatmul.mubr.bf16.gmra.mrb[0].mxu0 %v339
  %v622 = vpop.f32.mrb[0].mxu0
  %v623 = vadd.f32 %v85, %v622
  %v624 = vpop.f32.mrb[0].mxu0
  %v625 = vpop.f32.mrb[0].mxu0
  %v626 = vadd.f32 %v85, %v625
  %v627 = vpop.f32.mrb[0].mxu0
  %628 = vmatprep.mubr.bf16.mxu0 0
  %629 = vmatmul.mubr.bf16.gmra.mrb[0].mxu0 %v342
  %v630 = vpop.f32.mrb[0].mxu0
  %v631 = vadd.f32 %v85, %v630
  %v632 = vpop.f32.mrb[0].mxu0
  %v633 = vpop.f32.mrb[0].mxu0
  %v634 = vadd.f32 %v85, %v633
  %v635 = vpop.f32.mrb[0].mxu0
  %636 = vdwg.mxu0
  %v637 = vmax.f32 %v383, 0.0
  %v638 = vmax.f32 %v386, 0.0
  %v639 = vmax.f32 %v391, 0.0
  %v640 = vmax.f32 %v394, 0.0
  %v641 = vmax.f32 %v399, 0.0
  %v642 = vmax.f32 %v402, 0.0
  %v643 = vmax.f32 %v407, 0.0
  %v644 = vmax.f32 %v410, 0.0
  %v645 = vmax.f32 %v415, 0.0
  %v646 = vmax.f32 %v418, 0.0
  %v647 = vmax.f32 %v423, 0.0
  %v648 = vmax.f32 %v426, 0.0
  %v649 = vmax.f32 %v431, 0.0
  %v650 = vmax.f32 %v434, 0.0
  %v651 = vmax.f32 %v439, 0.0
  %v652 = vmax.f32 %v442, 0.0
  %v653 = vmax.f32 %v447, 0.0
  %v654 = vmax.f32 %v450, 0.0
  %v655 = vmax.f32 %v455, 0.0
  %v656 = vmax.f32 %v458, 0.0
  %v657 = vmax.f32 %v463, 0.0
  %v658 = vmax.f32 %v466, 0.0
  %v659 = vmax.f32 %v471, 0.0
  %v660 = vmax.f32 %v474, 0.0
  %v661 = vmax.f32 %v479, 0.0
  %v662 = vmax.f32 %v482, 0.0
  %v663 = vmax.f32 %v487, 0.0
  %v664 = vmax.f32 %v490, 0.0
  %v665 = vmax.f32 %v495, 0.0
  %v666 = vmax.f32 %v498, 0.0
  %v667 = vmax.f32 %v503, 0.0
  %v668 = vmax.f32 %v506, 0.0
  %v669 = vmax.f32 %v511, 0.0
  %v670 = vmax.f32 %v514, 0.0
  %v671 = vmax.f32 %v519, 0.0
  %v672 = vmax.f32 %v522, 0.0
  %v673 = vmax.f32 %v527, 0.0
  %v674 = vmax.f32 %v530, 0.0
  %v675 = vmax.f32 %v535, 0.0
  %v676 = vmax.f32 %v538, 0.0
  %v677 = vmax.f32 %v543, 0.0
  %v678 = vmax.f32 %v546, 0.0
  %v679 = vmax.f32 %v551, 0.0
  %v680 = vmax.f32 %v554, 0.0
  %v681 = vmax.f32 %v559, 0.0
  %v682 = vmax.f32 %v562, 0.0
  %v683 = vmax.f32 %v567, 0.0
  %v684 = vmax.f32 %v570, 0.0
  %v685 = vmax.f32 %v575, 0.0
  %v686 = vmax.f32 %v578, 0.0
  %v687 = vmax.f32 %v583, 0.0
  %v688 = vmax.f32 %v586, 0.0
  %v689 = vmax.f32 %v591, 0.0
  %v690 = vmax.f32 %v594, 0.0
  %v691 = vmax.f32 %v599, 0.0
  %v692 = vmax.f32 %v602, 0.0
  %v693 = vmax.f32 %v607, 0.0
  %v694 = vmax.f32 %v610, 0.0
  %v695 = vmax.f32 %v615, 0.0
  %v696 = vmax.f32 %v618, 0.0
  %v697 = vmax.f32 %v623, 0.0
  %v698 = vmax.f32 %v626, 0.0
  %v699 = vmax.f32 %v631, 0.0
  %v700 = vmax.f32 %v634, 0.0
  %v701 = vpack.c.bf16 %v638, %v637
  %v702 = vpack.c.bf16 %v640, %v639
  %v703 = vpack.c.bf16 %v642, %v641
  %v704 = vpack.c.bf16 %v644, %v643
  %v705 = vpack.c.bf16 %v646, %v645
  %v706 = vpack.c.bf16 %v648, %v647
  %v707 = vpack.c.bf16 %v650, %v649
  %v708 = vpack.c.bf16 %v652, %v651
  %v709 = vpack.c.bf16 %v654, %v653
  %v710 = vpack.c.bf16 %v656, %v655
  %v711 = vpack.c.bf16 %v658, %v657
  %v712 = vpack.c.bf16 %v660, %v659
  %v713 = vpack.c.bf16 %v662, %v661
  %v714 = vpack.c.bf16 %v664, %v663
  %v715 = vpack.c.bf16 %v666, %v665
  %v716 = vpack.c.bf16 %v668, %v667
  %v717 = vpack.c.bf16 %v670, %v669
  %v718 = vpack.c.bf16 %v672, %v671
  %v719 = vpack.c.bf16 %v674, %v673
  %v720 = vpack.c.bf16 %v676, %v675
  %v721 = vpack.c.bf16 %v678, %v677
  %v722 = vpack.c.bf16 %v680, %v679
  %v723 = vpack.c.bf16 %v682, %v681
  %v724 = vpack.c.bf16 %v684, %v683
  %v725 = vpack.c.bf16 %v686, %v685
  %v726 = vpack.c.bf16 %v688, %v687
  %v727 = vpack.c.bf16 %v690, %v689
  %v728 = vpack.c.bf16 %v692, %v691
  %v729 = vpack.c.bf16 %v694, %v693
  %v730 = vpack.c.bf16 %v696, %v695
  %v731 = vpack.c.bf16 %v698, %v697
  %v732 = vpack.c.bf16 %v700, %v699
  %v765 = vunpack.c.l.b16 %v701
  %v766 = vunpack.c.h.b16 %v701
  %v767 = vunpack.c.l.b16 %v702
  %v768 = vunpack.c.h.b16 %v702
  %v769 = vunpack.c.l.b16 %v703
  %v770 = vunpack.c.h.b16 %v703
  %v771 = vunpack.c.l.b16 %v704
  %v772 = vunpack.c.h.b16 %v704
  %v773 = vunpack.c.l.b16 %v705
  %v774 = vunpack.c.h.b16 %v705
  %v775 = vunpack.c.l.b16 %v706
  %v776 = vunpack.c.h.b16 %v706
  %v777 = vunpack.c.l.b16 %v707
  %v778 = vunpack.c.h.b16 %v707
  %v779 = vunpack.c.l.b16 %v708
  %v780 = vunpack.c.h.b16 %v708
  %v781 = vunpack.c.l.b16 %v709
  %v782 = vunpack.c.h.b16 %v709
  %v783 = vunpack.c.l.b16 %v710
  %v784 = vunpack.c.h.b16 %v710
  %v785 = vunpack.c.l.b16 %v711
  %v786 = vunpack.c.h.b16 %v711
  %v787 = vunpack.c.l.b16 %v712
  %v788 = vunpack.c.h.b16 %v712
  %v789 = vunpack.c.l.b16 %v713
  %v790 = vunpack.c.h.b16 %v713
  %v791 = vunpack.c.l.b16 %v714
  %v792 = vunpack.c.h.b16 %v714
  %v793 = vunpack.c.l.b16 %v715
  %v794 = vunpack.c.h.b16 %v715
  %v795 = vunpack.c.l.b16 %v716
  %v796 = vunpack.c.h.b16 %v716
  %v797 = vunpack.c.l.b16 %v717
  %v798 = vunpack.c.h.b16 %v717
  %v799 = vunpack.c.l.b16 %v718
  %v800 = vunpack.c.h.b16 %v718
  %v801 = vunpack.c.l.b16 %v719
  %v802 = vunpack.c.h.b16 %v719
  %v803 = vunpack.c.l.b16 %v720
  %v804 = vunpack.c.h.b16 %v720
  %v805 = vunpack.c.l.b16 %v721
  %v806 = vunpack.c.h.b16 %v721
  %v807 = vunpack.c.l.b16 %v722
  %v808 = vunpack.c.h.b16 %v722
  %v809 = vunpack.c.l.b16 %v723
  %v810 = vunpack.c.h.b16 %v723
  %v811 = vunpack.c.l.b16 %v724
  %v812 = vunpack.c.h.b16 %v724
  %v813 = vunpack.c.l.b16 %v725
  %v814 = vunpack.c.h.b16 %v725
  %v815 = vunpack.c.l.b16 %v726
  %v816 = vunpack.c.h.b16 %v726
  %v817 = vunpack.c.l.b16 %v727
  %v818 = vunpack.c.h.b16 %v727
  %v819 = vunpack.c.l.b16 %v728
  %v820 = vunpack.c.h.b16 %v728
  %v821 = vunpack.c.l.b16 %v729
  %v822 = vunpack.c.h.b16 %v729
  %v823 = vunpack.c.l.b16 %v730
  %v824 = vunpack.c.h.b16 %v730
  %v825 = vunpack.c.l.b16 %v731
  %v826 = vunpack.c.h.b16 %v731
  %v827 = vunpack.c.l.b16 %v732
  %v828 = vunpack.c.h.b16 %v732
  %v829 = vpack.c.b16 %v765, %v765
  %v830 = vpack.c.b16 %v766, %v766
  %v831 = vpack.c.b16 %v767, %v767
  %v832 = vpack.c.b16 %v768, %v768
  %v833 = vpack.c.b16 %v769, %v769
  %v834 = vpack.c.b16 %v770, %v770
  %v835 = vpack.c.b16 %v771, %v771
  %v836 = vpack.c.b16 %v772, %v772
  %v837 = vpack.c.b16 %v773, %v773
  %v838 = vpack.c.b16 %v774, %v774
  %v839 = vpack.c.b16 %v775, %v775
  %v840 = vpack.c.b16 %v776, %v776
  %v841 = vpack.c.b16 %v777, %v777
  %v842 = vpack.c.b16 %v778, %v778
  %v843 = vpack.c.b16 %v779, %v779
  %v844 = vpack.c.b16 %v780, %v780
  %v845 = vpack.c.b16 %v781, %v781
  %v846 = vpack.c.b16 %v782, %v782
  %v847 = vpack.c.b16 %v783, %v783
  %v848 = vpack.c.b16 %v784, %v784
  %v849 = vpack.c.b16 %v785, %v785
  %v850 = vpack.c.b16 %v786, %v786
  %v851 = vpack.c.b16 %v787, %v787
  %v852 = vpack.c.b16 %v788, %v788
  %v853 = vpack.c.b16 %v789, %v789
  %v854 = vpack.c.b16 %v790, %v790
  %v855 = vpack.c.b16 %v791, %v791
  %v856 = vpack.c.b16 %v792, %v792
  %v857 = vpack.c.b16 %v793, %v793
  %v858 = vpack.c.b16 %v794, %v794
  %v859 = vpack.c.b16 %v795, %v795
  %v860 = vpack.c.b16 %v796, %v796
  %v861 = vpack.c.b16 %v797, %v797
  %v862 = vpack.c.b16 %v798, %v798
  %v863 = vpack.c.b16 %v799, %v799
  %v864 = vpack.c.b16 %v800, %v800
  %v865 = vpack.c.b16 %v801, %v801
  %v866 = vpack.c.b16 %v802, %v802
  %v867 = vpack.c.b16 %v803, %v803
  %v868 = vpack.c.b16 %v804, %v804
  %v869 = vpack.c.b16 %v805, %v805
  %v870 = vpack.c.b16 %v806, %v806
  %v871 = vpack.c.b16 %v807, %v807
  %v872 = vpack.c.b16 %v808, %v808
  %v873 = vpack.c.b16 %v809, %v809
  %v874 = vpack.c.b16 %v810, %v810
  %v875 = vpack.c.b16 %v811, %v811
  %v876 = vpack.c.b16 %v812, %v812
  %v877 = vpack.c.b16 %v813, %v813
  %v878 = vpack.c.b16 %v814, %v814
  %v879 = vpack.c.b16 %v815, %v815
  %v880 = vpack.c.b16 %v816, %v816
  %v881 = vpack.c.b16 %v817, %v817
  %v882 = vpack.c.b16 %v818, %v818
  %v883 = vpack.c.b16 %v819, %v819
  %v884 = vpack.c.b16 %v820, %v820
  %v885 = vpack.c.b16 %v821, %v821
  %v886 = vpack.c.b16 %v822, %v822
  %v887 = vpack.c.b16 %v823, %v823
  %v888 = vpack.c.b16 %v824, %v824
  %v889 = vpack.c.b16 %v825, %v825
  %v890 = vpack.c.b16 %v826, %v826
  %v891 = vpack.c.b16 %v827, %v827
  %v892 = vpack.c.b16 %v828, %v828
  %vm957 = vcmask 257024
  %958 = vst.msk [vmem:[%s3] sm:$0xf] %vm957, %v829
  %959 = vst.msk [vmem:[%s3 + $0x4] sm:$0xf] %vm957, %v830
  %960 = vst.msk [vmem:[%s3 + $0x8] sm:$0xf] %vm957, %v831
  %961 = vst.msk [vmem:[%s3 + $0xc] sm:$0xf] %vm957, %v832
  %962 = vst.msk [vmem:[%s3 + $0x10] sm:$0xf] %vm957, %v833
  %963 = vst.msk [vmem:[%s3 + $0x14] sm:$0xf] %vm957, %v834
  %964 = vst.msk [vmem:[%s3 + $0x18] sm:$0xf] %vm957, %v835
  %965 = vst.msk [vmem:[%s3 + $0x1c] sm:$0xf] %vm957, %v836
  %966 = vst.msk [vmem:[%s3 + $0x20] sm:$0xf] %vm957, %v837
  %967 = vst.msk [vmem:[%s3 + $0x24] sm:$0xf] %vm957, %v838
  %968 = vst.msk [vmem:[%s3 + $0x28] sm:$0xf] %vm957, %v839
  %969 = vst.msk [vmem:[%s3 + $0x2c] sm:$0xf] %vm957, %v840
  %970 = vst.msk [vmem:[%s3 + $0x30] sm:$0xf] %vm957, %v841
  %971 = vst.msk [vmem:[%s3 + $0x34] sm:$0xf] %vm957, %v842
  %972 = vst.msk [vmem:[%s3 + $0x38] sm:$0xf] %vm957, %v843
  %973 = vst.msk [vmem:[%s3 + $0x3c] sm:$0xf] %vm957, %v844
  %974 = vst.msk [vmem:[%s3 + $0x40] sm:$0xf] %vm957, %v845
  %975 = vst.msk [vmem:[%s3 + $0x44] sm:$0xf] %vm957, %v846
  %976 = vst.msk [vmem:[%s3 + $0x48] sm:$0xf] %vm957, %v847
  %977 = vst.msk [vmem:[%s3 + $0x4c] sm:$0xf] %vm957, %v848
  %978 = vst.msk [vmem:[%s3 + $0x50] sm:$0xf] %vm957, %v849
  %979 = vst.msk [vmem:[%s3 + $0x54] sm:$0xf] %vm957, %v850
  %980 = vst.msk [vmem:[%s3 + $0x58] sm:$0xf] %vm957, %v851
  %981 = vst.msk [vmem:[%s3 + $0x5c] sm:$0xf] %vm957, %v852
  %982 = vst.msk [vmem:[%s3 + $0x60] sm:$0xf] %vm957, %v853
  %983 = vst.msk [vmem:[%s3 + $0x64] sm:$0xf] %vm957, %v854
  %984 = vst.msk [vmem:[%s3 + $0x68] sm:$0xf] %vm957, %v855
  %985 = vst.msk [vmem:[%s3 + $0x6c] sm:$0xf] %vm957, %v856
  %986 = vst.msk [vmem:[%s3 + $0x70] sm:$0xf] %vm957, %v857
  %987 = vst.msk [vmem:[%s3 + $0x74] sm:$0xf] %vm957, %v858
  %988 = vst.msk [vmem:[%s3 + $0x78] sm:$0xf] %vm957, %v859
  %989 = vst.msk [vmem:[%s3 + $0x7c] sm:$0xf] %vm957, %v860
  %990 = vst.msk [vmem:[%s3 + $0x80] sm:$0xf] %vm957, %v861
  %991 = vst.msk [vmem:[%s3 + $0x84] sm:$0xf] %vm957, %v862
  %992 = vst.msk [vmem:[%s3 + $0x88] sm:$0xf] %vm957, %v863
  %993 = vst.msk [vmem:[%s3 + $0x8c] sm:$0xf] %vm957, %v864
  %994 = vst.msk [vmem:[%s3 + $0x90] sm:$0xf] %vm957, %v865
  %995 = vst.msk [vmem:[%s3 + $0x94] sm:$0xf] %vm957, %v866
  %996 = vst.msk [vmem:[%s3 + $0x98] sm:$0xf] %vm957, %v867
  %997 = vst.msk [vmem:[%s3 + $0x9c] sm:$0xf] %vm957, %v868
  %998 = vst.msk [vmem:[%s3 + $0xa0] sm:$0xf] %vm957, %v869
  %999 = vst.msk [vmem:[%s3 + $0xa4] sm:$0xf] %vm957, %v870
  %1000 = vst.msk [vmem:[%s3 + $0xa8] sm:$0xf] %vm957, %v871
  %1001 = vst.msk [vmem:[%s3 + $0xac] sm:$0xf] %vm957, %v872
  %1002 = vst.msk [vmem:[%s3 + $0xb0] sm:$0xf] %vm957, %v873
  %1003 = vst.msk [vmem:[%s3 + $0xb4] sm:$0xf] %vm957, %v874
  %1004 = vst.msk [vmem:[%s3 + $0xb8] sm:$0xf] %vm957, %v875
  %1005 = vst.msk [vmem:[%s3 + $0xbc] sm:$0xf] %vm957, %v876
  %1006 = vst.msk [vmem:[%s3 + $0xc0] sm:$0xf] %vm957, %v877
  %1007 = vst.msk [vmem:[%s3 + $0xc4] sm:$0xf] %vm957, %v878
  %1008 = vst.msk [vmem:[%s3 + $0xc8] sm:$0xf] %vm957, %v879
  %1009 = vst.msk [vmem:[%s3 + $0xcc] sm:$0xf] %vm957, %v880
  %1010 = vst.msk [vmem:[%s3 + $0xd0] sm:$0xf] %vm957, %v881
  %1011 = vst.msk [vmem:[%s3 + $0xd4] sm:$0xf] %vm957, %v882
  %1012 = vst.msk [vmem:[%s3 + $0xd8] sm:$0xf] %vm957, %v883
  %1013 = vst.msk [vmem:[%s3 + $0xdc] sm:$0xf] %vm957, %v884
  %1014 = vst.msk [vmem:[%s3 + $0xe0] sm:$0xf] %vm957, %v885
  %1015 = vst.msk [vmem:[%s3 + $0xe4] sm:$0xf] %vm957, %v886
  %1016 = vst.msk [vmem:[%s3 + $0xe8] sm:$0xf] %vm957, %v887
  %1017 = vst.msk [vmem:[%s3 + $0xec] sm:$0xf] %vm957, %v888
  %1018 = vst.msk [vmem:[%s3 + $0xf0] sm:$0xf] %vm957, %v889
  %1019 = vst.msk [vmem:[%s3 + $0xf4] sm:$0xf] %vm957, %v890
  %1020 = vst.msk [vmem:[%s3 + $0xf8] sm:$0xf] %vm957, %v891
  %1021 = vst.msk [vmem:[%s3 + $0xfc] sm:$0xf] %vm957, %v892
  // Predicated region
  $region14: #{tpu_custom_call.1} parent=0 // pred_check
    _
  $region15: #{tpu_custom_call.1} parent=0 // pred_check_branch
    %1023 = sbr.rel (0) target = $region17
  $region16: #{tpu_custom_call.1} parent=0 // pred_region
    _
  $region17: #{tpu_custom_call.1} parent=0 // pred_fallthru
    _
  // Predicated region
  $region18: #{tpu_custom_call.1} parent=0 // pred_check
    _
  $region19: #{tpu_custom_call.1} parent=0 // pred_check_branch
    %1025 = sbr.rel (0) target = $region21
  $region20: #{tpu_custom_call.1} parent=0 // pred_region
    _
  $region21: #{tpu_custom_call.1} parent=0 // pred_fallthru
    _

</llo_original>
